<compile_context>
chip_gen: v7x
topology: tpu7x:2x2x1
jax: 0.10.0
libtpu: 0.0.40
codegen_flags: <defaults>
</compile_context>

<pallas_src>
import jax
import jax.numpy as jnp
from jax.experimental import pallas as pl
from jax.experimental.pallas import tpu as pltpu


_LANE = 128
_TM_TARGET = 512     # matmul rows per grid step (MXU M dimension)
_TP_MAX = 1024       # keep the whole padded pred_len in one lane-dense tile if <= this


def _round_up(x, m):
    return (x + m - 1) // m * m


def _vmem_limit_bytes():
    """Per-generation scoped-VMEM limit: phys - 16 MiB headroom, capped at 64 MiB.
    -> 64 MiB on v5e/v6e (128 MiB physical), ~48 MiB on v7x (64 MiB physical)."""
    phys = None
    try:
        info = pltpu.get_tpu_info()
        phys = getattr(info, "vmem_capacity_bytes", None)
    except Exception:
        phys = None
    if not phys:
        phys = 64 << 20                       # conservative (v7x per-core size)
    return int(min(max(phys - (16 << 20), 16 << 20), 64 << 20))


def _select_tiles(rows, F, P, esize, budget, *, prefer_two_row_blocks):
    """Pick (t_rows, t_p, t_f, Pp, Fp) for a tiled (rows, F) @ (F, P) matmul."""
    row_align = max(8, 32 // esize)           # f32 -> 8, bf16 -> 16, int8/fp8 -> 32
    tm = _round_up(min(rows, _TM_TARGET), row_align)

    Pp = _round_up(P, _LANE)
    if Pp <= _TP_MAX:
        tp = Pp                               # whole pred_len resident -> x read once
    else:
        tp = 512
        Pp = _round_up(P, tp)

    # v7x megacore: ensure at least one "parallel" grid axis has extent >= 2.
    if (prefer_two_row_blocks and rows > row_align
            and -(-rows // tm) == 1 and Pp == tp):
        tm = _round_up(-(-rows // 2), row_align)

    Fp = _round_up(F, _LANE)
    # Size the F chunk so x/W/bias/out double-buffers + f32 acc fit the budget.
    fixed = 2 * tp * esize + 2 * tm * tp * esize + tm * tp * 4
    per_tf = 2 * esize * (tm + tp)
    avail = max(budget - fixed, 0)
    tf_cap = (avail // per_tf // _LANE) * _LANE
    tf_cap = min(max(tf_cap, _LANE), Fp)
    tf = _LANE
    t = tf_cap
    while t >= _LANE:                         # largest exact divisor of Fp (no extra pad)
        if Fp % t == 0:
            tf = t
            break
        t -= _LANE
    return tm, tp, tf, Pp, Fp


def _make_head_kernel(k_axis):
    """Tiled matmul-with-bias kernel; reduction over grid axis `k_axis`."""
    def kernel(x_ref, w_ref, b_ref, o_ref, acc_ref):
        # x_ref: (rows, tf)  w_ref: (tf, tp)  b_ref: (1, tp)
        # o_ref: (rows, tp)  acc_ref: (rows, tp) f32 scratch
        @pl.when(pl.program_id(k_axis) == 0)
        def _init():
            acc_ref[...] = jnp.zeros_like(acc_ref)

        acc_ref[...] += jnp.dot(x_ref[...], w_ref[...],
                                preferred_element_type=jnp.float32)

        @pl.when(pl.program_id(k_axis) == pl.num_programs(k_axis) - 1)
        def _store():
            o_ref[...] = (acc_ref[...] +
                          b_ref[...].astype(jnp.float32)).astype(o_ref.dtype)

    return kernel


def _shared_head(x2, W, b, B, n_vars, P):
    """x2: (M, F) with M = B * n_vars;  W: (F, P);  b: (P,)."""
    M, F = x2.shape
    esize = jnp.dtype(x2.dtype).itemsize
    vmem_limit = _vmem_limit_bytes()
    budget = (vmem_limit * 3) // 4
    tm, tp, tf, Pp, Fp = _select_tiles(M, F, P, esize, budget,
                                       prefer_two_row_blocks=True)

    # Zero-pad only the reduction (F) axis: garbage x * garbage W could inject
    # NaN/Inf into real rows.  Row axis stays unpadded (Pallas masks the
    # partial trailing block; garbage lands only in discarded rows).
    xp = x2 if Fp == F else jnp.pad(x2, ((0, 0), (0, Fp - F)))
    Wp = W if (Fp, Pp) == (F, P) else jnp.pad(W, ((0, Fp - F), (0, Pp - P)))
    bp = b.reshape(1, P)
    if Pp != P:
        bp = jnp.pad(bp, ((0, 0), (0, Pp - P)))

    grid = (pl.cdiv(M, tm), Pp // tp, Fp // tf)
    out = pl.pallas_call(
        _make_head_kernel(k_axis=2),
        out_shape=jax.ShapeDtypeStruct((M, Pp), x2.dtype),
        grid_spec=pltpu.PrefetchScalarGridSpec(
            num_scalar_prefetch=0,
            grid=grid,
            in_specs=[
                pl.BlockSpec((tm, tf), lambda i, j, k: (i, k)),
                # Single shared weight/bias: index map independent of the row
                # grid axis -> same HBM block, no n_vars duplication.
                pl.BlockSpec((tf, tp), lambda i, j, k: (k, j)),
                pl.BlockSpec((1, tp), lambda i, j, k: (0, j)),
            ],
            out_specs=pl.BlockSpec((tm, tp), lambda i, j, k: (i, j)),
            scratch_shapes=[pltpu.VMEM((tm, tp), jnp.float32)],
        ),
        compiler_params=pltpu.CompilerParams(
            dimension_semantics=("parallel", "parallel", "arbitrary"),
            vmem_limit_bytes=vmem_limit),
    )(xp, Wp, bp)

    y = out[:, :P].reshape(B, n_vars, P)
    # TODO(synk): the final (B, P, n_vars) permutation stays an XLA transpose on
    # the (small) output tensor; drop it if the consumer accepts (B, n_vars, P).
    return jnp.transpose(y, (0, 2, 1))                    # (B, P, n_vars)


def _per_var_head(x3, W, b, B, n_vars, P):
    """x3: (B, n_vars, F);  W: (n_vars, F, P);  b: (n_vars, P)."""
    _, _, F = x3.shape
    esize = jnp.dtype(x3.dtype).itemsize
    vmem_limit = _vmem_limit_bytes()
    budget = (vmem_limit * 3) // 4
    tb, tp, tf, Pp, Fp = _select_tiles(B, F, P, esize, budget,
                                       prefer_two_row_blocks=False)

    xp = x3
    if Fp != F:
        # TODO(synk): only hit when F % 128 != 0 (rare for PatchTST configs);
        # costs one extra HBM pass over x for the reduction-axis zero-pad.
        xp = jnp.pad(x3, ((0, 0), (0, 0), (0, Fp - F)))
    # Row-contiguous flatten: each variable owns a 128-aligned column range of
    # x, so the kernel reads x in place -- no HBM transpose of x is needed.
    xp = xp.reshape(B, n_vars * Fp)

    Wp = W
    if (Fp, Pp) != (F, P):
        Wp = jnp.pad(W, ((0, 0), (0, Fp - F), (0, Pp - P)))
    bp = b.reshape(n_vars, 1, P)
    if Pp != P:
        bp = jnp.pad(bp, ((0, 0), (0, 0), (0, Pp - P)))

    KF = Fp // tf
    grid = (n_vars, pl.cdiv(B, tb), Pp // tp, KF)
    out = pl.pallas_call(
        _make_head_kernel(k_axis=3),
        out_shape=jax.ShapeDtypeStruct((n_vars, B, Pp), x3.dtype),
        grid_spec=pltpu.PrefetchScalarGridSpec(
            num_scalar_prefetch=0,
            grid=grid,
            in_specs=[
                # x block: (tb, tf) slice of (B, n_vars*Fp); column block
                # index = var * (Fp // tf) + k.
                pl.BlockSpec((tb, tf),
                             lambda v, bi, pi, ki: (bi, v * KF + ki)),
                pl.BlockSpec((None, tf, tp),
                             lambda v, bi, pi, ki: (v, ki, pi)),
                pl.BlockSpec((None, 1, tp),
                             lambda v, bi, pi, ki: (v, 0, pi)),
            ],
            out_specs=pl.BlockSpec((None, tb, tp),
                                   lambda v, bi, pi, ki: (v, bi, pi)),
            scratch_shapes=[pltpu.VMEM((tb, tp), jnp.float32)],
        ),
        compiler_params=pltpu.CompilerParams(
            dimension_semantics=("parallel", "parallel", "parallel",
                                 "arbitrary"),
            vmem_limit_bytes=vmem_limit),
    )(xp, Wp, bp)

    # (n_vars, B, P) -> (B, P, n_vars): cheap XLA transpose on the small output.
    return jnp.transpose(out[:, :, :P], (1, 2, 0))


def patchtst_prediction_head(x, weights, biases, n_vars, pred_len, shared_proj):
    """
    x:        (batch * n_vars, n_patches, d_model)
    weights:  shared -> (F, P);  per-var -> (n_vars, F, P)   [F = n_patches*d_model]
              (torch Linear weights pre-transposed: W_jax = W_torch.T)
    biases:   shared -> (P,);    per-var -> (n_vars, P)
    returns:  (batch, pred_len, n_vars)
    """
    BV, L, D = x.shape
    F = L * D
    B = BV // n_vars
    if shared_proj:
        # Fold n_vars into matmul rows: (B*n_vars, F) @ (F, P). Free reshape.
        return _shared_head(x.reshape(BV, F), weights, biases, B, n_vars,
                            pred_len)
    return _per_var_head(x.reshape(B, n_vars, F), weights, biases, B, n_vars,
                         pred_len)


def _reference_head(x, weights, biases, n_vars, pred_len, shared_proj):
    BV, L, D = x.shape
    B = BV // n_vars
    xf = x.reshape(B, n_vars, L * D)
    if shared_proj:
        y = xf @ weights + biases                          # (B, n_vars, P)
    else:
        y = jnp.einsum("bvf,vfp->bvp", xf, weights) + biases[None]
    return jnp.transpose(y, (0, 2, 1))                     # (B, P, n_vars)


def _run_case(key, B, n_vars, L, D, P):
    F = L * D
    k1, k2, k3, k4, k5 = jax.random.split(key, 5)
    x = jax.random.normal(k1, (B * n_vars, L, D), dtype=jnp.float32)
    W_per_var = jax.random.normal(k2, (n_vars, F, P), dtype=jnp.float32) * 0.02
    b_per_var = jax.random.normal(k3, (n_vars, P), dtype=jnp.float32) * 0.02
    W_shared = jax.random.normal(k4, (F, P), dtype=jnp.float32) * 0.02
    b_shared = jax.random.normal(k5, (P,), dtype=jnp.float32) * 0.02

    out_ns = patchtst_prediction_head(x, W_per_var, b_per_var, n_vars, P,
                                      shared_proj=False)
    out_sh = patchtst_prediction_head(x, W_shared, b_shared, n_vars, P,
                                      shared_proj=True)
    jax.block_until_ready((out_ns, out_sh))

    ref_ns = _reference_head(x, W_per_var, b_per_var, n_vars, P, False)
    ref_sh = _reference_head(x, W_shared, b_shared, n_vars, P, True)

    assert out_ns.shape == (B, P, n_vars)
    assert out_sh.shape == (B, P, n_vars)
    assert jnp.allclose(out_ns, ref_ns, atol=2e-5, rtol=2e-5)
    assert jnp.allclose(out_sh, ref_sh, atol=2e-5, rtol=2e-5)


if __name__ == "__main__":
    key = jax.random.PRNGKey(0)
    ka, kb = jax.random.split(key)

    # Aligned small case: batch=2, n_vars=4, n_patches=8, d_model=32, pred=16.
    _run_case(ka, B=2, n_vars=4, L=8, D=32, P=16)
    # Unaligned case (exercises F padding, partial row blocks, row-tile halving).
    _run_case(kb, B=3, n_vars=3, L=5, D=24, P=10)

    print("KERNEL_OK")
</pallas_src>

<mosaic_0001>
module attributes {stable_mosaic.version = 11 : i64} {
  func.func @kernel(%arg0: i32, %arg1: i32, %arg2: i32, %arg3: i32, %arg4: memref<8x256xf32, #tpu.memory_space<vmem>>, %arg5: memref<1x256x128xf32, #tpu.memory_space<vmem>>, %arg6: memref<1x1x128xf32, #tpu.memory_space<vmem>>, %arg7: memref<1x8x128xf32, #tpu.memory_space<vmem>>, %arg8: memref<8x128xf32, #tpu.memory_space<vmem>>) attributes {dimension_semantics = [#tpu.dimension_semantics<parallel>, #tpu.dimension_semantics<parallel>, #tpu.dimension_semantics<parallel>, #tpu.dimension_semantics<arbitrary>], iteration_bounds = array<i64: 4, 1, 1, 1>, scalar_prefetch = 0 : i64, scratch_operands = 1 : i64, tpu.core_type = #tpu.core_type<tc>, window_params = [{transform_indices = @transform_0, window_bounds = array<i64: 8, 256>}, {transform_indices = @transform_1, window_bounds = array<i64: 1, 256, 128>}, {transform_indices = @transform_2, window_bounds = array<i64: 1, 1, 128>}, {transform_indices = @transform_3, window_bounds = array<i64: 1, 8, 128>}]} {
    %c0_i32 = arith.constant 0 : i32
    %0 = arith.cmpi eq, %arg3, %c0_i32 : i32
    %1 = arith.extui %0 : i1 to i32
    %c0_i32_0 = arith.constant 0 : i32
    %2 = arith.cmpi ne, %1, %c0_i32_0 : i32
    scf.if %2 {
      %cst_11 = arith.constant 0.000000e+00 : f32
      %13 = vector.broadcast %cst_11 : f32 to vector<8x128xf32>
      %c0_12 = arith.constant 0 : index
      %c0_13 = arith.constant 0 : index
      %14 = vector.load %arg8[%c0_12, %c0_13] : memref<8x128xf32, #tpu.memory_space<vmem>>, vector<8x128xf32>
      tpu.vector_store %arg8[%c0_12, %c0_13], %13 {strides = array<i32>} : memref<8x128xf32, #tpu.memory_space<vmem>>, vector<8x128xf32>,
    } else {
    }
    %c0 = arith.constant 0 : index
    %c0_1 = arith.constant 0 : index
    %3 = vector.load %arg8[%c0, %c0_1] : memref<8x128xf32, #tpu.memory_space<vmem>>, vector<8x128xf32>
    %c0_2 = arith.constant 0 : index
    %c0_3 = arith.constant 0 : index
    %4 = vector.load %arg4[%c0_2, %c0_3] : memref<8x256xf32, #tpu.memory_space<vmem>>, vector<8x256xf32>
    %c0_4 = arith.constant 0 : index
    %c0_5 = arith.constant 0 : index
    %c0_6 = arith.constant 0 : index
    %5 = vector.load %arg5[%c0_4, %c0_5, %c0_6] : memref<1x256x128xf32, #tpu.memory_space<vmem>>, vector<1x256x128xf32>
    %6 = vector.shape_cast %5 : vector<1x256x128xf32> to vector<256x128xf32>
    %cst = arith.constant dense<0.000000e+00> : vector<8x128xf32>
    %7 = tpu.matmul %4, %6, %cst {dimension_numbers = #tpu.dot_dimension_numbers<[1], [0], [0], [1], [0, 0, 1, 1], [], []>} : vector<8x256xf32>, vector<256x128xf32>, vector<8x128xf32> -> vector<8x128xf32>
    %8 = arith.addf %3, %7 : vector<8x128xf32>
    %c0_7 = arith.constant 0 : index
    %c0_8 = arith.constant 0 : index
    %9 = vector.load %arg8[%c0_7, %c0_8] : memref<8x128xf32, #tpu.memory_space<vmem>>, vector<8x128xf32>
    tpu.vector_store %arg8[%c0_7, %c0_8], %8 {strides = array<i32>} : memref<8x128xf32, #tpu.memory_space<vmem>>, vector<8x128xf32>,
    %c0_i32_9 = arith.constant 0 : i32
    %10 = arith.cmpi eq, %arg3, %c0_i32_9 : i32
    %11 = arith.extui %10 : i1 to i32
    %c0_i32_10 = arith.constant 0 : i32
    %12 = arith.cmpi ne, %11, %c0_i32_10 : i32
    scf.if %12 {
      %c0_11 = arith.constant 0 : index
      %c0_12 = arith.constant 0 : index
      %13 = vector.load %arg8[%c0_11, %c0_12] : memref<8x128xf32, #tpu.memory_space<vmem>>, vector<8x128xf32>
      %c0_13 = arith.constant 0 : index
      %c0_14 = arith.constant 0 : index
      %c0_15 = arith.constant 0 : index
      %14 = vector.load %arg6[%c0_13, %c0_14, %c0_15] : memref<1x1x128xf32, #tpu.memory_space<vmem>>, vector<1x1x128xf32>
      %15 = vector.shape_cast %14 : vector<1x1x128xf32> to vector<1x128xf32>
      %16 = vector.broadcast %15 : vector<1x128xf32> to vector<8x128xf32>
      %17 = arith.addf %13, %16 : vector<8x128xf32>
      %c0_16 = arith.constant 0 : index
      %c0_17 = arith.constant 0 : index
      %c0_18 = arith.constant 0 : index
      %18 = vector.load %arg7[%c0_16, %c0_17, %c0_18] : memref<1x8x128xf32, #tpu.memory_space<vmem>>, vector<1x8x128xf32>
      %19 = vector.shape_cast %18 : vector<1x8x128xf32> to vector<8x128xf32>
      %20 = vector.shape_cast %17 : vector<8x128xf32> to vector<1x8x128xf32>
      tpu.vector_store %arg7[%c0_16, %c0_17, %c0_18], %20 {strides = array<i32>} : memref<1x8x128xf32, #tpu.memory_space<vmem>>, vector<1x8x128xf32>,
    } else {
    }
    return
  }
  func.func @transform_0(%arg0: i32, %arg1: i32, %arg2: i32, %arg3: i32) -> (i32, i32) {
    %c1_i32 = arith.constant 1 : i32
    %0 = arith.muli %arg0, %c1_i32 : i32
    %1 = arith.addi %0, %arg3 : i32
    %c0_i32 = arith.constant 0 : i32
    return %arg1, %1 : i32, i32
  }
  func.func @transform_1(%arg0: i32, %arg1: i32, %arg2: i32, %arg3: i32) -> (i32, i32, i32) {
    %c0_i32 = arith.constant 0 : i32
    return %arg0, %arg3, %arg2 : i32, i32, i32
  }
  func.func @transform_2(%arg0: i32, %arg1: i32, %arg2: i32, %arg3: i32) -> (i32, i32, i32) {
    %c0_i32 = arith.constant 0 : i32
    %c0_i32_0 = arith.constant 0 : i32
    return %arg0, %c0_i32, %arg2 : i32, i32, i32
  }
  func.func @transform_3(%arg0: i32, %arg1: i32, %arg2: i32, %arg3: i32) -> (i32, i32, i32) {
    %c0_i32 = arith.constant 0 : i32
    return %arg0, %arg1, %arg2 : i32, i32, i32
  }
}

</mosaic_0001>

<llo_original>
// kernel: tpu_custom_call.1
$region0: #{tpu_custom_call.1}
  #allocation0 [shape = 'u32[]', space=smem, size = 0x4, offset = 0x4, fixed_abs, tag = 'smem constant byte address 0x4 - core index']
  #allocation1 [shape = 'u32[144,128]{1,0:T(1,128)}', space=vmem, size = 0x12000, scoped, tag = 'internal scratch']
  #allocation2 [shape = 'f32[8,128]{1,0:T(8,128)}', space=vmem, size = 0x1000, scoped, tag = 'scratch operand']
  %s0 = inlined_call_operand.hbm [shape: f32[2,1024], index: 0, kind: input, shape index: {}]
  %s1 = inlined_call_operand.hbm [shape: f32[4,256,128], index: 1, kind: input, shape index: {}]
  %s2 = inlined_call_operand.vmem [shape: f32[4,1,128], index: 2, kind: input, shape index: {}]
  %s3 = inlined_call_operand.hbm [shape: f32[4,2,128], index: 3, kind: output, shape index: {}]
  %s4 = sld [smem:[#allocation0]]
  $region61: #{tpu_custom_call.1} parent=0
    _
  %s6 = ssub.s32 1, %s4
  %s7 = scalar_select 0, %s6, %s4
  $region1: #{tpu_custom_call.1} parent=0
    #allocation3 [shape = 'u8[16384]{0}', space=vmem, size = 0x4000, scoped, tag = 'input window, operand 0']
    #allocation4 [shape = 's32[2]{0}', space=sflag, size = 0x8, scoped, tag = 'scoped memory for tpu_custom_call.1']
    #allocation5 [shape = 's32[2]{0}', space=sflag, size = 0x8, scoped, tag = 'scoped memory for tpu_custom_call.1']
    #allocation6 [shape = 'u8[262144]{0}', space=vmem, size = 0x40000, scoped, tag = 'input window, operand 1']
    #allocation7 [shape = 's32[2]{0}', space=sflag, size = 0x8, scoped, tag = 'scoped memory for tpu_custom_call.1']
    #allocation8 [shape = 'u8[8192]{0}', space=vmem, size = 0x2000, scoped, tag = 'output window, operand 0']
    %8 = vsyncpa [#allocation4], 0
    %s9 = scalar_lea.sflag [#allocation4], 1
    %10 = vsyncpa %s9, 0
    %11 = vsyncpa [#allocation7], 0
    %s12 = scalar_lea.sflag [#allocation7], 1
    %13 = vsyncpa %s12, 0
    %14 = vsyncpa [#allocation5], 0
    %s15 = scalar_lea.sflag [#allocation5], 1
    %16 = vsyncpa %s15, 0
    loop: start=0, step=1, limit=6
    $region2: #{tpu_custom_call.1} parent=1 // loop_pre_header
      _
    $region3: #{tpu_custom_call.1} parent=1 // loop_header
      %s18 = sphi 0, %s22
      %p19 = scmp.ge.s32.totalorder %s18, 6
      %s25 = sphi 0, %s51
      %s26 = sphi 0, %s47
      %s27 = sphi 0, %s43
      %s28 = sphi 0, %s39
      %s29 = sphi 0, %s25
      %s30 = sphi 0, %s26
      %s31 = sphi 0, %s27
      %s32 = sphi 0, %s28
      %s33 = sphi 0, %s29
      %s34 = sphi 0, %s30
      %s35 = sphi 0, %s31
      %s36 = sphi 0, %s32
      %s58 = sphi 0, %s60
      %s61 = sphi 0, %s58
      %s62 = sphi 0, %s61
      %s78 = sphi 0, %s62
      %s88 = sphi 0, %s90
      %s91 = sphi 0, %s88
      %s92 = sphi 0, %s91
      %s108 = sphi 0, %s92
      %s116 = sphi 0, %s118
      %s119 = sphi 0, %s116
      %s120 = sphi 0, %s119
      %s136 = sphi 0, %s120
      %s146 = sphi 0, %s148
      %s149 = sphi 0, %s146
      %s150 = sphi 0, %s149
      %s166 = sphi 0, %s150
    $region4: #{tpu_custom_call.1} parent=1 // loop_header_branch
      %21 = sbr.rel (%p19) target = $region8
    $region5: #{tpu_custom_call.1} parent=1 // loop_body
      %s23 = ssub.s32 %s18, 1
      %s24 = ssub.s32 %s18, 2
      %s37 = sadd.s32 1, %s28
      %p38 = scmp.ge.s32.totalorder %s37, 1
      %s39 = scalar_select %p38, 0, %s37
      %s40 = sadd.s32 1, %s27
      %s41 = scalar_select %p38, %s40, %s27
      %p42 = scmp.ge.s32.totalorder %s41, 1
      %s43 = scalar_select %p42, 0, %s41
      %s44 = sadd.s32 1, %s26
      %s45 = scalar_select %p42, %s44, %s26
      %p46 = scmp.ge.s32.totalorder %s45, 1
      %s47 = scalar_select %p46, 0, %s45
      %s48 = sadd.s32 1, %s25
      %s49 = scalar_select %p46, %s48, %s25
      %p50 = scmp.ge.s32.totalorder %s49, 4
      %s51 = scalar_select %p50, 0, %s49
      %s52 = sadd.s32 %s25, %s28
      %s53 = sadd.s32 %s51, %s39
      %s54 = ssub.s32 %s26, %s47
      %s55 = ssub.s32 %s52, %s53
      %s56 = sor.u32 %s54, %s55
      %p57 = scmp.eq.s32.totalorder %s56, 0
      %s59 = sadd.s32 %s58, 1
      %s60 = scalar_select %p57, %s58, %s59
      %p63 = pneg %p57
      %p64 = scmp.eq.s32.totalorder %s18, 3
      %p65 = por %p63, %p64
      %p66 = scmp.ne.s32.totalorder %s58, %s61
      %p67 = scmp.eq.s32.totalorder %s18, 0
      %p68 = por %p66, %p67
      %p69 = scmp.ne.s32.totalorder %s58, %s61
      %p70 = scmp.eq.s32.totalorder %s23, 3
      %p71 = por %p69, %p70
      %p72 = scmp.ne.s32.totalorder %s61, %s62
      %p73 = scmp.eq.s32.totalorder %s23, 0
      %p74 = por %p72, %p73
      %p75 = scmp.ne.s32.totalorder %s61, %s62
      %p76 = scmp.eq.s32.totalorder %s24, 3
      %p77 = por %p75, %p76
      %p79 = scmp.ne.s32.totalorder %s62, %s78
      %p80 = scmp.eq.s32.totalorder %s24, 0
      %p81 = por %p79, %p80
      %s82 = ssub.s32 %s25, %s51
      %s83 = ssub.s32 %s28, %s39
      %s84 = sor.u32 %s82, %s83
      %s85 = ssub.s32 %s27, %s43
      %s86 = sor.u32 %s84, %s85
      %p87 = scmp.eq.s32.totalorder %s86, 0
      %s89 = sadd.s32 %s88, 1
      %s90 = scalar_select %p87, %s88, %s89
      %p93 = pneg %p87
      %p94 = scmp.eq.s32.totalorder %s18, 3
      %p95 = por %p93, %p94
      %p96 = scmp.ne.s32.totalorder %s88, %s91
      %p97 = scmp.eq.s32.totalorder %s18, 0
      %p98 = por %p96, %p97
      %p99 = scmp.ne.s32.totalorder %s88, %s91
      %p100 = scmp.eq.s32.totalorder %s23, 3
      %p101 = por %p99, %p100
      %p102 = scmp.ne.s32.totalorder %s91, %s92
      %p103 = scmp.eq.s32.totalorder %s23, 0
      %p104 = por %p102, %p103
      %p105 = scmp.ne.s32.totalorder %s91, %s92
      %p106 = scmp.eq.s32.totalorder %s24, 3
      %p107 = por %p105, %p106
      %p109 = scmp.ne.s32.totalorder %s92, %s108
      %p110 = scmp.eq.s32.totalorder %s24, 0
      %p111 = por %p109, %p110
      %s112 = ssub.s32 %s25, %s51
      %s113 = ssub.s32 %s27, %s43
      %s114 = sor.u32 %s112, %s113
      %p115 = scmp.eq.s32.totalorder %s114, 0
      %s117 = sadd.s32 %s116, 1
      %s118 = scalar_select %p115, %s116, %s117
      %p121 = pneg %p115
      %p122 = scmp.eq.s32.totalorder %s18, 3
      %p123 = por %p121, %p122
      %p124 = scmp.ne.s32.totalorder %s116, %s119
      %p125 = scmp.eq.s32.totalorder %s18, 0
      %p126 = por %p124, %p125
      %p127 = scmp.ne.s32.totalorder %s116, %s119
      %p128 = scmp.eq.s32.totalorder %s23, 3
      %p129 = por %p127, %p128
      %p130 = scmp.ne.s32.totalorder %s119, %s120
      %p131 = scmp.eq.s32.totalorder %s23, 0
      %p132 = por %p130, %p131
      %p133 = scmp.ne.s32.totalorder %s119, %s120
      %p134 = scmp.eq.s32.totalorder %s24, 3
      %p135 = por %p133, %p134
      %p137 = scmp.ne.s32.totalorder %s120, %s136
      %p138 = scmp.eq.s32.totalorder %s24, 0
      %p139 = por %p137, %p138
      %s140 = ssub.s32 %s25, %s51
      %s141 = ssub.s32 %s26, %s47
      %s142 = sor.u32 %s140, %s141
      %s143 = ssub.s32 %s27, %s43
      %s144 = sor.u32 %s142, %s143
      %p145 = scmp.eq.s32.totalorder %s144, 0
      %s147 = sadd.s32 %s146, 1
      %s148 = scalar_select %p145, %s146, %s147
      %p151 = pneg %p145
      %p152 = scmp.eq.s32.totalorder %s18, 3
      %p153 = por %p151, %p152
      %p154 = scmp.ne.s32.totalorder %s146, %s149
      %p155 = scmp.eq.s32.totalorder %s18, 0
      %p156 = por %p154, %p155
      %p157 = scmp.ne.s32.totalorder %s146, %s149
      %p158 = scmp.eq.s32.totalorder %s23, 3
      %p159 = por %p157, %p158
      %p160 = scmp.ne.s32.totalorder %s149, %s150
      %p161 = scmp.eq.s32.totalorder %s23, 0
      %p162 = por %p160, %p161
      %p163 = scmp.ne.s32.totalorder %s149, %s150
      %p164 = scmp.eq.s32.totalorder %s24, 3
      %p165 = por %p163, %p164
      %p167 = scmp.ne.s32.totalorder %s150, %s166
      %p168 = scmp.eq.s32.totalorder %s24, 0
      %p169 = por %p167, %p168
      %p170 = scmp.le.s32.totalorder 1, %s18
      %p171 = scmp.lt.s32.totalorder %s18, 5
      %p172 = pnand %p170, %p171
      %p173 = pneg %p172
      // Predicated region
      $region9: #{tpu_custom_call.1} parent=5 // pred_check
        _
      $region10: #{tpu_custom_call.1} parent=5 // pred_check_branch
        %175 = sbr.rel (%p172) target = $region12
      $region11: #{tpu_custom_call.1} parent=5 // pred_region
        %s176 = ssub.s32 %s18, 1
      $region12: #{tpu_custom_call.1} parent=5 // pred_fallthru
        _
      %p177 = scmp.lt.s32.totalorder %s18, 4
      // Predicated region
      $region13: #{tpu_custom_call.1} parent=5 // pred_check
        %p178 = pneg %p177
      $region14: #{tpu_custom_call.1} parent=5 // pred_check_branch
        %180 = sbr.rel (%p178) target = $region16
      $region15: #{tpu_custom_call.1} parent=5 // pred_region
        // Predicated region
        $region17: #{tpu_custom_call.1} parent=15 // pred_check
          %p181 = pneg %p68
        $region18: #{tpu_custom_call.1} parent=15 // pred_check_branch
          %183 = sbr.rel (%p181) target = $region20
        $region19: #{tpu_custom_call.1} parent=15 // pred_region
          %s184 = sand.u32 %s58, 1
          %s185 = scalar_lea.sflag [#allocation4], %s184
          %s186 = sand.u32 %s58, 1
          %s187 = smul.addr %s186, 16
          %s188 = scalar_lea.vmem [#allocation3], %s187
          %s189 = sadd.s32 %s25, %s28
          %s190 = smul.u32 4, %s26
          %s191 = smul.u32 2, %s189
          %s192 = ssub.s32 1, %s190
          %s193 = smul.u32 32, %s192
          %s194 = smul.u32 %s193, 2
          %s196 = ssub.s32 256, %s194
          %197 = vsyncadd %s185, %s196
          %p198 = scmp.ne.s32.totalorder 0, %s194
          %s199 = smul.addr %s190, 8
          %s200 = sadd.s32 %s191, %s199
          %s201 = smul.addr %s200, 32
          %s202 = scalar_lea.hbm %s0, %s201
          %s203 = smul.u32 4, %s192
          %s204 = sshll.u32 %s188, 4
          %s205 = int_to_ptr.vmem [resolvable:$true] %s204
          %s206 = sshll.u32 %s203, 4
          %210 = dma.hbm_to_vmem [thread:$0]  (%p198), %s202, %s206, %s205, %s185, 256, 64, 4
        $region20: #{tpu_custom_call.1} parent=15 // pred_fallthru
          _
        // Predicated region
        $region21: #{tpu_custom_call.1} parent=15 // pred_check
          %p211 = pneg %p98
        $region22: #{tpu_custom_call.1} parent=15 // pred_check_branch
          %213 = sbr.rel (%p211) target = $region24
        $region23: #{tpu_custom_call.1} parent=15 // pred_region
          %s214 = sand.u32 %s88, 1
          %s215 = scalar_lea.sflag [#allocation7], %s214
          %s216 = sand.u32 %s88, 1
          %s217 = smul.addr %s216, 256
          %s218 = scalar_lea.vmem [#allocation6], %s217
          %s219 = smul.u32 32, %s28
          %s221 = ssub.s32 4096, 4096
          %222 = vsyncadd %s215, %s221
          %s223 = sadd.s32 %s27, %s219
          %s224 = smul.addr %s25, 32
          %s225 = sadd.s32 %s223, %s224
          %s226 = smul.addr %s225, 128
          %s227 = scalar_lea.hbm %s1, %s226
          %s228 = sshll.u32 %s218, 4
          %s229 = int_to_ptr.vmem [resolvable:$true] %s228
          %234 = dma.hbm_to_vmem [thread:$0]  %s227, 4096, %s229, %s215, 128, 128, 8
        $region24: #{tpu_custom_call.1} parent=15 // pred_fallthru
          _
        // Predicated region
        $region25: #{tpu_custom_call.1} parent=15 // pred_check
          %p235 = pneg %p126
        $region26: #{tpu_custom_call.1} parent=15 // pred_check_branch
          %237 = sbr.rel (%p235) target = $region28
        $region27: #{tpu_custom_call.1} parent=15 // pred_region
          %p238 = scmp.lt.s32.totalorder %s25, 3
          %s239 = scalar_select %p238, %s25, 3
          %p240 = scmp.lt.s32.totalorder %s27, 0
          %s241 = scalar_select %p240, %s27, 0
          %s242 = sadd.s32 %s241, %s239
          %s243 = scalar_lea.vmem %s2, %s242
        $region28: #{tpu_custom_call.1} parent=15 // pred_fallthru
          _
      $region16: #{tpu_custom_call.1} parent=5 // pred_fallthru
        _
      %p244 = scmp.le.s32.totalorder 1, %s18
      %p245 = scmp.lt.s32.totalorder %s18, 5
      %p246 = pnand %p244, %p245
      %p247 = pneg %p246
      // Predicated region
      $region29: #{tpu_custom_call.1} parent=5 // pred_check
        _
      $region30: #{tpu_custom_call.1} parent=5 // pred_check_branch
        %249 = sbr.rel (%p246) target = $region32
      $region31: #{tpu_custom_call.1} parent=5 // pred_region
        %s250 = ssub.s32 %s18, 1
        %s251 = sand.u32 %s61, 1
        %s252 = scalar_lea.sflag [#allocation4], %s251
        %s253 = sand.u32 %s61, 1
        %s254 = smul.addr %s253, 16
        %s255 = scalar_lea.vmem [#allocation3], %s254
        // Predicated region
        $region33: #{tpu_custom_call.1} parent=31 // pred_check
          %p256 = pneg %p74
        $region34: #{tpu_custom_call.1} parent=31 // pred_check_branch
          %258 = sbr.rel (%p256) target = $region36
        $region35: #{tpu_custom_call.1} parent=31 // pred_region
          %259 = dma.done %s252, 256
        $region36: #{tpu_custom_call.1} parent=31 // pred_fallthru
          _
        %s260 = sand.u32 %s91, 1
        %s261 = scalar_lea.sflag [#allocation7], %s260
        %s262 = sand.u32 %s91, 1
        %s263 = smul.addr %s262, 256
        %s264 = scalar_lea.vmem [#allocation6], %s263
        // Predicated region
        $region37: #{tpu_custom_call.1} parent=31 // pred_check
          %p265 = pneg %p104
        $region38: #{tpu_custom_call.1} parent=31 // pred_check_branch
          %267 = sbr.rel (%p265) target = $region40
        $region39: #{tpu_custom_call.1} parent=31 // pred_region
          %268 = dma.done %s261, 4096
        $region40: #{tpu_custom_call.1} parent=31 // pred_fallthru
          _
        %s269 = sand.u32 %s61, 1
        %s270 = scalar_lea.sflag [#allocation4], %s269
        %s271 = sand.u32 %s61, 1
        %s272 = smul.addr %s271, 16
        %s273 = scalar_lea.vmem [#allocation3], %s272
        %p274 = pneg %p74
        %p275 = pneg %p71
        %s276 = sand.u32 %s91, 1
        %s277 = scalar_lea.sflag [#allocation7], %s276
        %s278 = sand.u32 %s91, 1
        %s279 = smul.addr %s278, 256
        %s280 = scalar_lea.vmem [#allocation6], %s279
        %p281 = pneg %p104
        %p282 = pneg %p101
        %p283 = scmp.lt.s32.totalorder %s29, 3
        %s284 = scalar_select %p283, %s29, 3
        %p285 = scmp.lt.s32.totalorder %s31, 0
        %s286 = scalar_select %p285, %s31, 0
        %s287 = sadd.s32 %s286, %s284
        %s288 = scalar_lea.vmem %s2, %s287
        %p289 = pneg %p132
        %p290 = pneg %p129
        %p291 = pneg %p162
        %p292 = pneg %p159
        %s293 = sand.u32 %s149, 1
        %s294 = scalar_lea.sflag [#allocation5], %s293
        %s295 = sand.u32 %s149, 1
        %s296 = smul.addr %s295, 8
        %s297 = scalar_lea.vmem [#allocation8], %s296
        %s298 = sadd.s32 %s29, %s32
        %s299 = smul.u32 4, %s30
        %s300 = smul.u32 2, %s298
        %s301 = ssub.s32 1, %s299
        %s302 = smul.u32 32, %s301
        %s303 = smul.u32 %s302, 2
        %s304 = smul.u32 32, %s32
        %p305 = scmp.lt.s32.totalorder %s29, 3
        %s306 = scalar_select %p305, %s29, 3
        %p307 = scmp.lt.s32.totalorder %s31, 0
        %s308 = scalar_select %p307, %s31, 0
        %s309 = sadd.s32 %s308, %s306
        %s310 = scalar_lea.vmem %s2, %s309
        %s311 = smul.u32 4, %s30
        %s312 = ssub.s32 1, %s311
        %s313 = smul.u32 32, %s312
        %p314 = scmp.eq.s32.totalorder %s32, 0
        // Predicated region
        $region41: #{tpu_custom_call.1} parent=31 // pred_check
          %p315 = pneg %p314
        $region42: #{tpu_custom_call.1} parent=31 // pred_check_branch
          %317 = sbr.rel (%p315) target = $region44
        $region43: #{tpu_custom_call.1} parent=31 // pred_region
          %318 = vst [vmem:[#allocation2] sm:$0xff] 0.0
        $region44: #{tpu_custom_call.1} parent=31 // pred_fallthru
          _
        %v319 = vld [vmem:[#allocation2] sm:$0xff]
        %v320 = vld [vmem:[%s255] sm:$0xf]
        %v321 = vld [vmem:[%s255 + $0x4] sm:$0xf]
        %v322 = vld [vmem:[%s255 + $0x8] sm:$0xf]
        %v323 = vld [vmem:[%s255 + $0xc] sm:$0xf]
        %v324 = vld [vmem:[%s264] sm:$0xff]
        %v325 = vld [vmem:[%s264 + $0x8] sm:$0xff]
        %v326 = vld [vmem:[%s264 + $0x10] sm:$0xff]
        %v327 = vld [vmem:[%s264 + $0x18] sm:$0xff]
        %v328 = vld [vmem:[%s264 + $0x20] sm:$0xff]
        %v329 = vld [vmem:[%s264 + $0x28] sm:$0xff]
        %v330 = vld [vmem:[%s264 + $0x30] sm:$0xff]
        %v331 = vld [vmem:[%s264 + $0x38] sm:$0xff]
        %v332 = vld [vmem:[%s264 + $0x40] sm:$0xff]
        %v333 = vld [vmem:[%s264 + $0x48] sm:$0xff]
        %v334 = vld [vmem:[%s264 + $0x50] sm:$0xff]
        %v335 = vld [vmem:[%s264 + $0x58] sm:$0xff]
        %v336 = vld [vmem:[%s264 + $0x60] sm:$0xff]
        %v337 = vld [vmem:[%s264 + $0x68] sm:$0xff]
        %v338 = vld [vmem:[%s264 + $0x70] sm:$0xff]
        %v339 = vld [vmem:[%s264 + $0x78] sm:$0xff]
        %v340 = vld [vmem:[%s264 + $0x80] sm:$0xff]
        %v341 = vld [vmem:[%s264 + $0x88] sm:$0xff]
        %v342 = vld [vmem:[%s264 + $0x90] sm:$0xff]
        %v343 = vld [vmem:[%s264 + $0x98] sm:$0xff]
        %v344 = vld [vmem:[%s264 + $0xa0] sm:$0xff]
        %v345 = vld [vmem:[%s264 + $0xa8] sm:$0xff]
        %v346 = vld [vmem:[%s264 + $0xb0] sm:$0xff]
        %v347 = vld [vmem:[%s264 + $0xb8] sm:$0xff]
        %v348 = vld [vmem:[%s264 + $0xc0] sm:$0xff]
        %v349 = vld [vmem:[%s264 + $0xc8] sm:$0xff]
        %v350 = vld [vmem:[%s264 + $0xd0] sm:$0xff]
        %v351 = vld [vmem:[%s264 + $0xd8] sm:$0xff]
        %v352 = vld [vmem:[%s264 + $0xe0] sm:$0xff]
        %v353 = vld [vmem:[%s264 + $0xe8] sm:$0xff]
        %v354 = vld [vmem:[%s264 + $0xf0] sm:$0xff]
        %v355 = vld [vmem:[%s264 + $0xf8] sm:$0xff]
        %v360 = vcombine.low %v320, %v321
        %v361 = vcombine.low %v322, %v323
        %v363 = vunpack.c.l.s4 1983009808
        %v364 = vunpack.c.0.s8 %v363
        %v365 = vlaneseq
        %v366 = vshrl.u32 %v365, 7
        %v367 = vsub.s32 %v364, %v366
        %v368 = vrot.slane %v360, %v367
        %v370 = vunpack.c.l.s4 1983009808
        %v371 = vunpack.c.0.s8 %v370
        %v372 = vlaneseq
        %v373 = vshrl.u32 %v372, 7
        %v374 = vsub.s32 %v371, %v373
        %v375 = vrot.slane %v361, %v374
        %v376 = vcombine.low %v368, %v375
        %v377 = vcombine.high %v368, %v375
        %380 = vmatprep.subr.mxu0 0.0
        %381 = vmatpush1.msra.mxu0 %v324
        %382 = vmatprep.subr.mxu0 0.0
        %383 = vmatpush1.msra.mxu0 %v325
        %384 = vmatprep.subr.mxu0 0.0
        %385 = vmatpush1.msra.mxu0 %v326
        %386 = vmatprep.subr.mxu0 0.0
        %387 = vmatpush1.msra.mxu0 %v327
        %388 = vmatprep.subr.mxu0 0.0
        %389 = vmatpush1.msra.mxu0 %v328
        %390 = vmatprep.subr.mxu0 0.0
        %391 = vmatpush1.msra.mxu0 %v329
        %392 = vmatprep.subr.mxu0 0.0
        %393 = vmatpush1.msra.mxu0 %v330
        %394 = vmatprep.subr.mxu0 0.0
        %395 = vmatpush1.msra.mxu0 %v331
        %396 = vmatprep.subr.mxu0 0.0
        %397 = vmatpush1.msra.mxu0 %v332
        %398 = vmatprep.subr.mxu0 0.0
        %399 = vmatpush1.msra.mxu0 %v333
        %400 = vmatprep.subr.mxu0 0.0
        %401 = vmatpush1.msra.mxu0 %v334
        %402 = vmatprep.subr.mxu0 0.0
        %403 = vmatpush1.msra.mxu0 %v335
        %404 = vmatprep.subr.mxu0 0.0
        %405 = vmatpush1.msra.mxu0 %v336
        %406 = vmatprep.subr.mxu0 0.0
        %407 = vmatpush1.msra.mxu0 %v337
        %408 = vmatprep.subr.mxu0 0.0
        %409 = vmatpush1.msra.mxu0 %v338
        %410 = vmatprep.subr.mxu0 0.0
        %411 = vmatpush1.msra.mxu0 %v339
        %412 = vmatprep.subr.mxu0 0.0
        %413 = vmatpush1.msra.mxu0 %v340
        %414 = vmatprep.subr.mxu0 0.0
        %415 = vmatpush1.msra.mxu0 %v341
        %416 = vmatprep.subr.mxu0 0.0
        %417 = vmatpush1.msra.mxu0 %v342
        %418 = vmatprep.subr.mxu0 0.0
        %419 = vmatpush1.msra.mxu0 %v343
        %420 = vmatprep.subr.mxu0 0.0
        %421 = vmatpush1.msra.mxu0 %v344
        %422 = vmatprep.subr.mxu0 0.0
        %423 = vmatpush1.msra.mxu0 %v345
        %424 = vmatprep.subr.mxu0 0.0
        %425 = vmatpush1.msra.mxu0 %v346
        %426 = vmatprep.subr.mxu0 0.0
        %427 = vmatpush1.msra.mxu0 %v347
        %428 = vmatprep.subr.mxu0 0.0
        %429 = vmatpush1.msra.mxu0 %v348
        %430 = vmatprep.subr.mxu0 0.0
        %431 = vmatpush1.msra.mxu0 %v349
        %432 = vmatprep.subr.mxu0 0.0
        %433 = vmatpush1.msra.mxu0 %v350
        %434 = vmatprep.subr.mxu0 0.0
        %435 = vmatpush1.msra.mxu0 %v351
        %436 = vmatprep.subr.mxu0 0.0
        %437 = vmatpush1.msra.mxu0 %v352
        %438 = vmatprep.subr.mxu0 0.0
        %439 = vmatpush1.msra.mxu0 %v353
        %440 = vmatprep.subr.mxu0 0.0
        %441 = vmatpush1.msra.mxu0 %v354
        %442 = vmatprep.subr.mxu0 0.0
        %443 = vmatpush1.msra.mxu0 %v355
        %444 = vmatprep.mubr.f32.mxu0 %v377
        %445 = vmatmul.mubr.f32.gmra.mrb[0].mxu0 %v376
        %v446 = vpop.f32.mrb[0].mxu0
        %v447 = vadd.f32 0.0, %v446
        %v448 = vpop.f32.mrb[0].mxu0
        %449 = vdwg.mxu0
        %v450 = vadd.f32 %v319, %v447
        %451 = vst [vmem:[#allocation2] sm:$0xff] %v450
        // Predicated region
        $region45: #{tpu_custom_call.1} parent=31 // pred_check
          %p452 = pneg %p314
        $region46: #{tpu_custom_call.1} parent=31 // pred_check_branch
          %454 = sbr.rel (%p452) target = $region48
        $region47: #{tpu_custom_call.1} parent=31 // pred_region
          %v455 = vld [vmem:[#allocation2] sm:$0xff]
          %v456 = vld [vmem:[%s310] sm:$0x1]
          %v458 = vlaneseq
          %v459 = vshrl.u32 %v458, 7
          %v460 = vsub.s32 0, %v459
          %v461 = vrot.slane %v456, %v460
          %v463 = vadd.f32 %v455, %v461
          %464 = vst [vmem:[%s297] sm:$0xff] %v463
        $region48: #{tpu_custom_call.1} parent=31 // pred_fallthru
          _
        %s465 = sand.u32 %s149, 1
        %s466 = scalar_lea.sflag [#allocation5], %s465
        %s467 = sand.u32 %s149, 1
        %s468 = smul.addr %s467, 8
        %s469 = scalar_lea.vmem [#allocation8], %s468
        // Predicated region
        $region49: #{tpu_custom_call.1} parent=31 // pred_check
          %p470 = pneg %p159
        $region50: #{tpu_custom_call.1} parent=31 // pred_check_branch
          %472 = sbr.rel (%p470) target = $region52
        $region51: #{tpu_custom_call.1} parent=31 // pred_region
          %s473 = smul.u32 4, %s30
          %s474 = ssub.s32 1, %s473
          %s475 = smul.u32 32, %s474
          %s477 = ssub.s32 128, %s475
          %478 = vsyncadd %s466, %s477
          %p479 = scmp.ne.s32.totalorder 0, %s475
          %s480 = sadd.s32 %s31, %s473
          %s481 = sadd.s32 %s480, %s29
          %s482 = smul.addr %s481, 32
          %s483 = scalar_lea.hbm %s3, %s482
          %s484 = smul.u32 2, %s474
          %s485 = sshll.u32 %s469, 4
          %s486 = int_to_ptr.vmem [resolvable:$true] %s485
          %s487 = sshll.u32 %s484, 4
          %491 = dma.vmem_to_hbm [thread:$0]  (%p479), %s486, %s487, %s483, %s466, 32, 32, 2
        $region52: #{tpu_custom_call.1} parent=31 // pred_fallthru
          _
      $region32: #{tpu_custom_call.1} parent=5 // pred_fallthru
        _
      %p492 = scmp.le.s32.totalorder 2, %s18
      // Predicated region
      $region53: #{tpu_custom_call.1} parent=5 // pred_check
        %p493 = pneg %p492
      $region54: #{tpu_custom_call.1} parent=5 // pred_check_branch
        %495 = sbr.rel (%p493) target = $region56
      $region55: #{tpu_custom_call.1} parent=5 // pred_region
        %s496 = ssub.s32 %s18, 2
        // Predicated region
        $region57: #{tpu_custom_call.1} parent=55 // pred_check
          %p497 = pneg %p165
        $region58: #{tpu_custom_call.1} parent=55 // pred_check_branch
          %499 = sbr.rel (%p497) target = $region60
        $region59: #{tpu_custom_call.1} parent=55 // pred_region
          %s500 = sand.u32 %s150, 1
          %s501 = scalar_lea.sflag [#allocation5], %s500
          %s502 = sand.u32 %s150, 1
          %s503 = smul.addr %s502, 8
          %s504 = scalar_lea.vmem [#allocation8], %s503
          %505 = dma.done %s501, 128
        $region60: #{tpu_custom_call.1} parent=55 // pred_fallthru
          _
      $region56: #{tpu_custom_call.1} parent=5 // pred_fallthru
        _
    $region6: #{tpu_custom_call.1} parent=1 // loop_footer
      %s22 = sadd.s32 1, %s18
    $region7: #{tpu_custom_call.1} parent=1 // loop_footer_branch
      %17 = sbr.rel target = $region3
    $region8: #{tpu_custom_call.1} parent=1 // loop_exit
      _
    %506 = vsyncpa [#allocation4], 1
    %s507 = scalar_lea.sflag [#allocation4], 1
    %508 = vsyncpa %s507, 1
    %509 = vsyncpa [#allocation7], 1
    %s510 = scalar_lea.sflag [#allocation7], 1
    %511 = vsyncpa %s510, 1
    %512 = vsyncpa [#allocation5], 1
    %s513 = scalar_lea.sflag [#allocation5], 1
    %514 = vsyncpa %s513, 1

</llo_original>
